<compile_context>
chip_gen: v7x
topology: tpu7x:2x2x1
jax: 0.10.0
libtpu: 0.0.40
codegen_flags: <defaults>
</compile_context>

<pallas_src>
import functools
import math

import jax
import jax.numpy as jnp
from jax.experimental import pallas as pl
from jax.experimental.pallas import tpu as pltpu


def _round_up(x, m):
    return (x + m - 1) // m * m


def _vmem_capacity_bytes():
    """Physical VMEM of the current chip; conservative 64 MiB fallback."""
    try:
        info = pltpu.get_tpu_info()
        cap = getattr(info, "vmem_capacity_bytes", None)
        if cap:
            return int(cap)
    except Exception:
        pass
    return 64 << 20


def _pick_vol_tile(d_vol, target, prefer_even_tiles):
    """Pick a lane-dense (multiple-of-128) d_vol tile.

    Pads d_vol only to the next multiple of 128 and picks TN as a divisor of
    that (no dead W2 columns).  Falls back to a padded non-divisor tile only
    if the divisors are pathologically small relative to the target.
    """
    d_vol_128 = _round_up(d_vol, 128)
    if d_vol_128 <= target:
        return d_vol_128, d_vol_128
    n128 = d_vol_128 // 128
    cands = [128 * d for d in range(1, n128 + 1)
             if n128 % d == 0 and 128 * d <= target]
    best = max(cands)                      # always contains 128
    if best * 4 >= target:                 # divisor tile close enough to target
        tn = best
        if prefer_even_tiles:
            # even tile count balances the 2 TensorCores on v7x megacore
            even = [c for c in cands
                    if (d_vol_128 // c) % 2 == 0 and 5 * c >= 4 * best]
            if even:
                tn = max(even)
        return tn, d_vol_128
    # Divisors are all tiny; accept up to (target-128) padded dead columns.
    tn = _round_up(target, 128)
    return tn, _round_up(d_vol, tn)


def staae_decoder_kernel(x_ref, wqkv_ref, bqkv_ref, w1_ref, b1_ref,
                         w2_ref, b2_ref, out_ref, *, scale, approx_recip):
    # x block: (TB, S, d_latent); out block: (TB*S, TN)  (TN = d_vol tile)
    x = x_ref[...]
    tb, s, d_lat = x.shape
    cdt = x.dtype
    xf = x.reshape(tb * s, d_lat)          # fold batch tile -> dense MXU M-dim

    # Fused Q/K/V projection (one dense N = 3*d_emd2 matmul), f32 accumulation.
    qkv = jnp.dot(xf, wqkv_ref[...],
                  preferred_element_type=jnp.float32) + bqkv_ref[...]
    d_e2 = qkv.shape[-1] // 3
    q = qkv[:, :d_e2].reshape(tb, s, d_e2).astype(cdt)
    k = qkv[:, d_e2:2 * d_e2].reshape(tb, s, d_e2).astype(cdt)
    v = qkv[:, 2 * d_e2:].reshape(tb, s, d_e2).astype(cdt)

    # Scaled dot-product attention, batched over the folded batch tile.
    scores = jnp.einsum("bqd,bkd->bqk", q, k,
                        preferred_element_type=jnp.float32) * scale
    scores = scores - jnp.max(scores, axis=-1, keepdims=True)   # stable softmax
    p = jnp.exp(scores)
    denom = jnp.sum(p, axis=-1, keepdims=True)
    if approx_recip:
        p = p * pl.reciprocal(denom, approx=True)
    else:
        p = p / denom
    a = jnp.einsum("bqk,bkd->bqd", p.astype(cdt), v,
                   preferred_element_type=jnp.float32)
    a = a.reshape(tb * s, d_e2).astype(cdt)

    # Decoder MLP with tanh activations; W2 is only the current d_vol tile.
    # Pre-activations cast to compute dtype first (EUP bf16 rate on v6e/v7x).
    h = jnp.tanh((jnp.dot(a, w1_ref[...], preferred_element_type=jnp.float32)
                  + b1_ref[...]).astype(cdt))
    y = jnp.tanh((jnp.dot(h, w2_ref[...], preferred_element_type=jnp.float32)
                  + b2_ref[...]).astype(cdt))
    out_ref[...] = y.astype(out_ref.dtype)           # flat (TB*S, TN) store


def staae_decoder(x, params, *, compute_dtype=jnp.bfloat16,
                  vol_tile=None, batch_tile=None, w2_buffers=None):
    """x: (B, S, d_latent).  Returns (B, S, d_vol) in compute_dtype."""
    B, S, d_latent = x.shape
    wq, bq, wk, bk, wv, bv, w1, b1, w2, b2 = params
    d_emd2 = wq.shape[1]
    d_emd1 = w1.shape[1]
    d_vol = w2.shape[1]
    scale = 1.0 / math.sqrt(d_emd2)          # d_k = query.size(-1) AFTER projection

    cdt = jnp.dtype(compute_dtype)
    itemsize = cdt.itemsize

    vmem_cap = _vmem_capacity_bytes()
    big_vmem = vmem_cap >= (100 << 20)        # v5e/v6e (128 MiB) vs v7x (64 MiB)

    # ---- d_vol tiling ------------------------------------------------------
    if vol_tile is None:
        if big_vmem:
            vol_tile = 8192 if itemsize <= 2 else 4096
        else:
            vol_tile = 4096 if itemsize <= 2 else 2048
    TN, d_vol_p = _pick_vol_tile(d_vol, vol_tile,
                                 prefer_even_tiles=not big_vmem)
    n_vol = d_vol_p // TN

    # ---- batch tiling ------------------------------------------------------
    if batch_tile is None:
        rows_target = 1024 if big_vmem else 512
        batch_tile = min(B, max(1, -(-rows_target // S)))
    TB = batch_tile
    # keep TB*S a multiple of 8 sublanes
    TB = _round_up(TB, 8 // math.gcd(S, 8))
    B_p = _round_up(B, TB)
    n_b = B_p // TB
    TBS = TB * S

    # ---- pad / fuse params (zeros are harmless, sliced off below) ----------
    xc = x.astype(cdt)
    if B_p != B:
        xc = jnp.pad(xc, ((0, B_p - B), (0, 0), (0, 0)))
    wqkv = jnp.concatenate([wq, wk, wv], axis=1).astype(cdt)   # (d_lat, 3*d_emd2)
    bqkv = jnp.concatenate([bq, bk, bv], axis=1).astype(cdt)   # (1, 3*d_emd2)
    w1c, b1c = w1.astype(cdt), b1.astype(cdt)
    w2p, b2p = w2.astype(cdt), b2.astype(cdt)
    if d_vol_p != d_vol:
        w2p = jnp.pad(w2p, ((0, 0), (0, d_vol_p - d_vol)))
        b2p = jnp.pad(b2p, ((0, 0), (0, d_vol_p - d_vol)))

    # ---- VMEM budget (derived from the chip's actual capacity) -------------
    n_w2_buf = w2_buffers if (w2_buffers is not None and w2_buffers > 2) else 2
    resident = (d_latent * 3 * d_emd2 + 3 * d_emd2
                + d_emd2 * d_emd1 + d_emd1) * itemsize
    streamed = ((TBS * d_latent + TBS * TN) * itemsize * 2
                + (d_emd1 * TN + TN) * itemsize * n_w2_buf)
    temps = TBS * (3 * d_emd2 + d_emd1 + TN + S) * 4      # f32 intermediates
    vmem_limit = 2 * resident + streamed + temps + (16 << 20)
    vmem_cap85 = int(0.85 * vmem_cap)
    vmem_limit = int(min(max(vmem_limit, 16 << 20), vmem_cap85))

    # ---- advisory cost estimate for the XLA scheduler -----------------------
    steps = n_vol * n_b
    flops = 2 * steps * TBS * (3 * d_latent * d_emd2 + 2 * S * d_emd2
                               + d_emd2 * d_emd1 + d_emd1 * TN)
    transc = steps * TBS * (S + d_emd1 + TN)
    bytes_acc = (n_vol * B_p * S * d_latent * itemsize
                 + (d_latent * 3 * d_emd2 + d_emd2 * d_emd1) * itemsize
                 + (d_emd1 + 1) * d_vol_p * itemsize
                 + B_p * S * d_vol_p * itemsize)
    cost = pl.CostEstimate(flops=int(flops), transcendentals=int(transc),
                           bytes_accessed=int(bytes_acc))

    # W2 / b2 tile specs; optional deeper buffering for slow-HBM parts (v5e).
    w2_kwargs = {}
    if w2_buffers is not None and w2_buffers > 2:
        w2_kwargs = dict(pipeline_mode=pl.Buffered(w2_buffers))
    w2_spec = pl.BlockSpec((d_emd1, TN), lambda j, b: (0, j), **w2_kwargs)
    b2_spec = pl.BlockSpec((1, TN), lambda j, b: (0, j), **w2_kwargs)

    rep2 = lambda j, b: (0, 0)
    kernel = functools.partial(staae_decoder_kernel, scale=scale,
                               approx_recip=(itemsize <= 2))

    out2d = pl.pallas_call(
        kernel,
        out_shape=jax.ShapeDtypeStruct((B_p * S, d_vol_p), cdt),
        grid_spec=pltpu.PrefetchScalarGridSpec(
            num_scalar_prefetch=0,
            # vol tiles outer, batch tiles inner: W2/b2 block index depends
            # only on j, so each W2 tile stays VMEM-resident across the whole
            # inner batch sweep -> W2 streams from HBM exactly once.
            grid=(n_vol, n_b),
            in_specs=[
                pl.BlockSpec((TB, S, d_latent), lambda j, b: (b, 0, 0)),   # x
                pl.BlockSpec((d_latent, 3 * d_emd2), rep2),                # Wqkv
                pl.BlockSpec((1, 3 * d_emd2), rep2),                       # bqkv
                pl.BlockSpec((d_emd2, d_emd1), rep2),                      # W1
                pl.BlockSpec((1, d_emd1), rep2),                           # b1
                w2_spec,                                                   # W2 tile
                b2_spec,                                                   # b2 tile
            ],
            out_specs=pl.BlockSpec((TBS, TN), lambda j, b: (b, j)),
        ),
        compiler_params=pltpu.CompilerParams(
            dimension_semantics=("parallel", "arbitrary"),
            vmem_limit_bytes=vmem_limit),
        cost_estimate=cost,
    )(xc, wqkv, bqkv, w1c, b1c, w2p, b2p)

    out = out2d.reshape(B_p, S, d_vol_p)
    return out[:B, :, :d_vol]


def reference_decoder(x, params):
    """Pure-JAX reference of the PyTorch forward for correctness checking."""
    wq, bq, wk, bk, wv, bv, w1, b1, w2, b2 = params
    q = x @ wq + bq
    k = x @ wk + bk
    v = x @ wv + bv
    d_k = q.shape[-1]
    scores = jnp.einsum("bqd,bkd->bqk", q, k) / math.sqrt(d_k)
    p = jax.nn.softmax(scores, axis=-1)
    a = jnp.einsum("bqk,bkd->bqd", p, v)
    h = jnp.tanh(a @ w1 + b1)
    return jnp.tanh(h @ w2 + b2)


def make_params(key, d_latent, d_emd2, d_emd1, d_vol):
    ks = jax.random.split(key, 10)
    init = lambda k, shape, fan_in: (jax.random.uniform(
        k, shape, jnp.float32, -1.0, 1.0) / math.sqrt(fan_in))
    wq = init(ks[0], (d_latent, d_emd2), d_latent)
    bq = init(ks[1], (1, d_emd2), d_latent)
    wk = init(ks[2], (d_latent, d_emd2), d_latent)
    bk = init(ks[3], (1, d_emd2), d_latent)
    wv = init(ks[4], (d_latent, d_emd2), d_latent)
    bv = init(ks[5], (1, d_emd2), d_latent)
    w1 = init(ks[6], (d_emd2, d_emd1), d_emd2)
    b1 = init(ks[7], (1, d_emd1), d_emd2)
    w2 = init(ks[8], (d_emd1, d_vol), d_emd1)
    b2 = init(ks[9], (1, d_vol), d_emd1)
    return (wq, bq, wk, bk, wv, bv, w1, b1, w2, b2)


if __name__ == "__main__":
    # Small shapes consistent with the module (scaled down from the defaults
    # d_latent=64, d_emd2=128, d_emd1=512, d_vol=28549).  d_vol deliberately
    # not a multiple of 128 to exercise the pad-and-slice path.
    B, S = 2, 8
    d_latent, d_emd2, d_emd1, d_vol = 32, 64, 128, 250

    key = jax.random.PRNGKey(0)
    kx, kp = jax.random.split(key)
    x = jax.random.normal(kx, (B, S, d_latent), jnp.float32)
    params = make_params(kp, d_latent, d_emd2, d_emd1, d_vol)

    ref = reference_decoder(x, params)

    # f32 path, auto tiling: tight check against the pure-JAX reference.
    out_f32 = jax.block_until_ready(
        staae_decoder(x, params, compute_dtype=jnp.float32))
    assert out_f32.shape == (B, S, d_vol)
    assert jnp.allclose(out_f32, ref, atol=5e-5, rtol=5e-5), (
        f"f32 max abs err {jnp.max(jnp.abs(out_f32 - ref))}")

    # f32 path with forced small tiles: exercises the multi-tile grid
    # (2 vol tiles x 2 batch tiles) and batch padding.
    out_tiled = jax.block_until_ready(
        staae_decoder(x, params, compute_dtype=jnp.float32,
                      vol_tile=128, batch_tile=1))
    assert out_tiled.shape == (B, S, d_vol)
    assert jnp.allclose(out_tiled, ref, atol=5e-5, rtol=5e-5), (
        f"tiled f32 max abs err {jnp.max(jnp.abs(out_tiled - ref))}")

    # bf16 path (deployment configuration): loose tolerance (tanh-bounded out).
    out_bf16 = jax.block_until_ready(
        staae_decoder(x, params, compute_dtype=jnp.bfloat16))
    assert out_bf16.shape == (B, S, d_vol)
    err = jnp.max(jnp.abs(out_bf16.astype(jnp.float32) - ref))
    assert err < 0.1, f"bf16 max abs err {err}"

    print("KERNEL_OK")
</pallas_src>

<mosaic_0001>
module attributes {stable_mosaic.version = 11 : i64} {
  func.func @staae_decoder_kernel(%arg0: i32, %arg1: i32, %arg2: memref<2x8x32xf32, #tpu.memory_space<vmem>>, %arg3: memref<32x192xf32, #tpu.memory_space<vmem>>, %arg4: memref<1x192xf32, #tpu.memory_space<vmem>>, %arg5: memref<64x128xf32, #tpu.memory_space<vmem>>, %arg6: memref<1x128xf32, #tpu.memory_space<vmem>>, %arg7: memref<128x256xf32, #tpu.memory_space<vmem>>, %arg8: memref<1x256xf32, #tpu.memory_space<vmem>>, %arg9: memref<16x256xf32, #tpu.memory_space<vmem>>) attributes {dimension_semantics = [#tpu.dimension_semantics<parallel>, #tpu.dimension_semantics<arbitrary>], iteration_bounds = array<i64: 1, 1>, scalar_prefetch = 0 : i64, scratch_operands = 0 : i64, tpu.core_type = #tpu.core_type<tc>, window_params = [{transform_indices = @transform_0, window_bounds = array<i64: 2, 8, 32>}, {pipeline_mode = #tpu.pipeline_mode<synchronous>, transform_indices = @transform_1, window_bounds = array<i64: 32, 192>}, {pipeline_mode = #tpu.pipeline_mode<synchronous>, transform_indices = @transform_2, window_bounds = array<i64: 1, 192>}, {pipeline_mode = #tpu.pipeline_mode<synchronous>, transform_indices = @transform_3, window_bounds = array<i64: 64, 128>}, {pipeline_mode = #tpu.pipeline_mode<synchronous>, transform_indices = @transform_4, window_bounds = array<i64: 1, 128>}, {transform_indices = @transform_5, window_bounds = array<i64: 128, 256>}, {transform_indices = @transform_6, window_bounds = array<i64: 1, 256>}, {transform_indices = @transform_7, window_bounds = array<i64: 16, 256>}]} {
    %c0 = arith.constant 0 : index
    %c0_0 = arith.constant 0 : index
    %c0_1 = arith.constant 0 : index
    %0 = vector.load %arg2[%c0, %c0_0, %c0_1] : memref<2x8x32xf32, #tpu.memory_space<vmem>>, vector<2x8x32xf32>
    %1 = vector.shape_cast %0 : vector<2x8x32xf32> to vector<16x32xf32>
    %c0_2 = arith.constant 0 : index
    %c0_3 = arith.constant 0 : index
    %2 = vector.load %arg3[%c0_2, %c0_3] : memref<32x192xf32, #tpu.memory_space<vmem>>, vector<32x192xf32>
    %cst = arith.constant dense<0.000000e+00> : vector<16x192xf32>
    %3 = tpu.matmul %1, %2, %cst {dimension_numbers = #tpu.dot_dimension_numbers<[1], [0], [0], [1], [0, 0, 1, 1], [], []>} : vector<16x32xf32>, vector<32x192xf32>, vector<16x192xf32> -> vector<16x192xf32>
    %c0_4 = arith.constant 0 : index
    %c0_5 = arith.constant 0 : index
    %4 = vector.load %arg4[%c0_4, %c0_5] : memref<1x192xf32, #tpu.memory_space<vmem>>, vector<1x192xf32>
    %5 = vector.broadcast %4 : vector<1x192xf32> to vector<16x192xf32>
    %6 = arith.addf %3, %5 : vector<16x192xf32>
    %7 = vector.extract_strided_slice %6 {offsets = [0, 0], sizes = [16, 64], strides = [1, 1]} : vector<16x192xf32> to vector<16x64xf32>
    %8 = vector.shape_cast %7 : vector<16x64xf32> to vector<2x8x64xf32>
    %9 = vector.extract_strided_slice %6 {offsets = [0, 64], sizes = [16, 64], strides = [1, 1]} : vector<16x192xf32> to vector<16x64xf32>
    %10 = vector.shape_cast %9 : vector<16x64xf32> to vector<2x8x64xf32>
    %11 = vector.extract_strided_slice %6 {offsets = [0, 128], sizes = [16, 64], strides = [1, 1]} : vector<16x192xf32> to vector<16x64xf32>
    %12 = vector.shape_cast %11 : vector<16x64xf32> to vector<2x8x64xf32>
    "tpu.trace_start"() <{level = 10 : i32, message = "bqd,bkd->bqk"}> : () -> ()
    %cst_6 = arith.constant dense<0.000000e+00> : vector<2x8x8xf32>
    %13 = tpu.matmul %8, %10, %cst_6 {dimension_numbers = #tpu.dot_dimension_numbers<[2], [2], [1], [1], [0, 0, 0, 1, 1, 1], [0], [0]>} : vector<2x8x64xf32>, vector<2x8x64xf32>, vector<2x8x8xf32> -> vector<2x8x8xf32>
    "tpu.trace_stop"() : () -> ()
    %cst_7 = arith.constant 1.250000e-01 : f32
    %14 = vector.broadcast %cst_7 : f32 to vector<2x8x8xf32>
    %15 = arith.mulf %13, %14 : vector<2x8x8xf32>
    %cst_8 = arith.constant dense<0xFF800000> : vector<2x8xf32>
    %16 = vector.multi_reduction <maximumf>, %15, %cst_8 [2] : vector<2x8x8xf32> to vector<2x8xf32>
    %17 = vector.shape_cast %16 : vector<2x8xf32> to vector<2x8x1xf32>
    %18 = vector.broadcast %17 : vector<2x8x1xf32> to vector<2x8x8xf32>
    %19 = arith.subf %15, %18 : vector<2x8x8xf32>
    %20 = math.exp %19 : vector<2x8x8xf32>
    %cst_9 = arith.constant dense<0.000000e+00> : vector<2x8xf32>
    %21 = vector.multi_reduction <add>, %20, %cst_9 [2] : vector<2x8x8xf32> to vector<2x8xf32>
    %22 = vector.shape_cast %21 : vector<2x8xf32> to vector<2x8x1xf32>
    %23 = vector.broadcast %22 : vector<2x8x1xf32> to vector<2x8x8xf32>
    %24 = arith.divf %20, %23 : vector<2x8x8xf32>
    "tpu.trace_start"() <{level = 10 : i32, message = "bqk,bkd->bqd"}> : () -> ()
    %cst_10 = arith.constant dense<0.000000e+00> : vector<2x8x64xf32>
    %25 = tpu.matmul %24, %12, %cst_10 {dimension_numbers = #tpu.dot_dimension_numbers<[2], [1], [1], [2], [0, 0, 0, 1, 1, 2], [0], [0]>} : vector<2x8x8xf32>, vector<2x8x64xf32>, vector<2x8x64xf32> -> vector<2x8x64xf32>
    "tpu.trace_stop"() : () -> ()
    %26 = vector.shape_cast %25 : vector<2x8x64xf32> to vector<16x64xf32>
    %c0_11 = arith.constant 0 : index
    %c0_12 = arith.constant 0 : index
    %27 = vector.load %arg5[%c0_11, %c0_12] : memref<64x128xf32, #tpu.memory_space<vmem>>, vector<64x128xf32>
    %cst_13 = arith.constant dense<0.000000e+00> : vector<16x128xf32>
    %28 = tpu.matmul %26, %27, %cst_13 {dimension_numbers = #tpu.dot_dimension_numbers<[1], [0], [0], [1], [0, 0, 1, 1], [], []>} : vector<16x64xf32>, vector<64x128xf32>, vector<16x128xf32> -> vector<16x128xf32>
    %c0_14 = arith.constant 0 : index
    %c0_15 = arith.constant 0 : index
    %29 = vector.load %arg6[%c0_14, %c0_15] : memref<1x128xf32, #tpu.memory_space<vmem>>, vector<1x128xf32>
    %30 = vector.broadcast %29 : vector<1x128xf32> to vector<16x128xf32>
    %31 = arith.addf %28, %30 : vector<16x128xf32>
    %32 = math.tanh %31 : vector<16x128xf32>
    %c0_16 = arith.constant 0 : index
    %c0_17 = arith.constant 0 : index
    %33 = vector.load %arg7[%c0_16, %c0_17] : memref<128x256xf32, #tpu.memory_space<vmem>>, vector<128x256xf32>
    %cst_18 = arith.constant dense<0.000000e+00> : vector<16x256xf32>
    %34 = tpu.matmul %32, %33, %cst_18 {dimension_numbers = #tpu.dot_dimension_numbers<[1], [0], [0], [1], [0, 0, 1, 1], [], []>} : vector<16x128xf32>, vector<128x256xf32>, vector<16x256xf32> -> vector<16x256xf32>
    %c0_19 = arith.constant 0 : index
    %c0_20 = arith.constant 0 : index
    %35 = vector.load %arg8[%c0_19, %c0_20] : memref<1x256xf32, #tpu.memory_space<vmem>>, vector<1x256xf32>
    %36 = vector.broadcast %35 : vector<1x256xf32> to vector<16x256xf32>
    %37 = arith.addf %34, %36 : vector<16x256xf32>
    %38 = math.tanh %37 : vector<16x256xf32>
    %c0_21 = arith.constant 0 : index
    %c0_22 = arith.constant 0 : index
    %39 = vector.load %arg9[%c0_21, %c0_22] : memref<16x256xf32, #tpu.memory_space<vmem>>, vector<16x256xf32>
    tpu.vector_store %arg9[%c0_21, %c0_22], %38 {strides = array<i32>} : memref<16x256xf32, #tpu.memory_space<vmem>>, vector<16x256xf32>,
    return
  }
  func.func @transform_0(%arg0: i32, %arg1: i32) -> (i32, i32, i32) {
    %c0_i32 = arith.constant 0 : i32
    %c0_i32_0 = arith.constant 0 : i32
    %c0_i32_1 = arith.constant 0 : i32
    return %arg1, %c0_i32, %c0_i32_0 : i32, i32, i32
  }
  func.func @transform_1(%arg0: i32, %arg1: i32) -> (i32, i32) {
    %c0_i32 = arith.constant 0 : i32
    %c0_i32_0 = arith.constant 0 : i32
    %c0_i32_1 = arith.constant 0 : i32
    return %c0_i32, %c0_i32_0 : i32, i32
  }
  func.func @transform_2(%arg0: i32, %arg1: i32) -> (i32, i32) {
    %c0_i32 = arith.constant 0 : i32
    %c0_i32_0 = arith.constant 0 : i32
    %c0_i32_1 = arith.constant 0 : i32
    return %c0_i32, %c0_i32_0 : i32, i32
  }
  func.func @transform_3(%arg0: i32, %arg1: i32) -> (i32, i32) {
    %c0_i32 = arith.constant 0 : i32
    %c0_i32_0 = arith.constant 0 : i32
    %c0_i32_1 = arith.constant 0 : i32
    return %c0_i32, %c0_i32_0 : i32, i32
  }
  func.func @transform_4(%arg0: i32, %arg1: i32) -> (i32, i32) {
    %c0_i32 = arith.constant 0 : i32
    %c0_i32_0 = arith.constant 0 : i32
    %c0_i32_1 = arith.constant 0 : i32
    return %c0_i32, %c0_i32_0 : i32, i32
  }
  func.func @transform_5(%arg0: i32, %arg1: i32) -> (i32, i32) {
    %c0_i32 = arith.constant 0 : i32
    %c0_i32_0 = arith.constant 0 : i32
    return %c0_i32, %arg0 : i32, i32
  }
  func.func @transform_6(%arg0: i32, %arg1: i32) -> (i32, i32) {
    %c0_i32 = arith.constant 0 : i32
    %c0_i32_0 = arith.constant 0 : i32
    return %c0_i32, %arg0 : i32, i32
  }
  func.func @transform_7(%arg0: i32, %arg1: i32) -> (i32, i32) {
    %c0_i32 = arith.constant 0 : i32
    return %arg1, %arg0 : i32, i32
  }
}

</mosaic_0001>

<llo_original>
// kernel: tpu_custom_call.1
$region0: #{tpu_custom_call.1}
  #allocation0 [shape = 'u32[]', space=smem, size = 0x4, offset = 0x4, fixed_abs, tag = 'smem constant byte address 0x4 - core index']
  #allocation1 [shape = 'u32[144,128]{1,0:T(1,128)}', space=vmem, size = 0x12000, scoped, tag = 'internal scratch']
  %s0 = inlined_call_operand.hbm [shape: f32[2,8,32], index: 0, kind: input, shape index: {}]
  %s1 = inlined_call_operand.hbm [shape: f32[32,192], index: 1, kind: input, shape index: {}]
  %s2 = inlined_call_operand.vmem [shape: f32[1,192], index: 2, kind: input, shape index: {}]
  %s3 = inlined_call_operand.hbm [shape: f32[64,128], index: 3, kind: input, shape index: {}]
  %s4 = inlined_call_operand.vmem [shape: f32[1,128], index: 4, kind: input, shape index: {}]
  %s5 = inlined_call_operand.hbm [shape: f32[128,256], index: 5, kind: input, shape index: {}]
  %s6 = inlined_call_operand.vmem [shape: f32[1,256], index: 6, kind: input, shape index: {}]
  %s7 = inlined_call_operand.hbm [shape: f32[16,256], index: 7, kind: output, shape index: {}]
  %s8 = sld [smem:[#allocation0]]
  $region54: #{tpu_custom_call.1} parent=0
    _
  %s10 = ssub.s32 1, %s8
  %s11 = scalar_select 0, %s10, %s8
  $region1: #{tpu_custom_call.1} parent=0
    #allocation2 [shape = 'u8[8192]{0}', space=vmem, size = 0x2000, scoped, tag = 'input window, operand 0, single buffered']
    #allocation3 [shape = 's32[1]{0}', space=sflag, size = 0x4, scoped, tag = 'scoped memory for tpu_custom_call.1']
    #allocation4 [shape = 's32[1]{0}', space=sflag, size = 0x4, scoped, tag = 'scoped memory for tpu_custom_call.1']
    #allocation5 [shape = 'u8[32768]{0}', space=vmem, size = 0x8000, scoped, tag = 'input window, operand 1, single buffered']
    #allocation6 [shape = 's32[1]{0}', space=sflag, size = 0x4, scoped, tag = 'scoped memory for tpu_custom_call.1']
    #allocation7 [shape = 'u8[32768]{0}', space=vmem, size = 0x8000, scoped, tag = 'input window, operand 3, single buffered']
    #allocation8 [shape = 'u8[131072]{0}', space=vmem, size = 0x20000, scoped, tag = 'input window, operand 5, single buffered']
    #allocation9 [shape = 's32[1]{0}', space=sflag, size = 0x4, scoped, tag = 'scoped memory for tpu_custom_call.1']
    #allocation10 [shape = 'u8[16384]{0}', space=vmem, size = 0x4000, scoped, tag = 'output window, operand 0, single buffered']
    %12 = vsyncpa [#allocation3], 0
    %13 = vsyncpa [#allocation6], 0
    %14 = vsyncpa [#allocation9], 0
    %15 = vsyncpa [#allocation4], 0
    // Predicated region
    $region2: #{tpu_custom_call.1} parent=1 // pred_check
      _
    $region3: #{tpu_custom_call.1} parent=1 // pred_check_branch
      %17 = sbr.rel (0) target = $region5
    $region4: #{tpu_custom_call.1} parent=1 // pred_region
      %s19 = ssub.s32 256, 256
      %20 = vsyncadd [#allocation3], %s19
      %s21 = sshll.u32 [#allocation2], 4
      %s22 = int_to_ptr.vmem [resolvable:$true] %s21
      %27 = dma.hbm_to_vmem [thread:$0]  %s0, 256, %s22, [#allocation3], 128, 128, 8
    $region5: #{tpu_custom_call.1} parent=1 // pred_fallthru
      _
    // Predicated region
    $region6: #{tpu_custom_call.1} parent=1 // pred_check
      _
    $region7: #{tpu_custom_call.1} parent=1 // pred_check_branch
      %29 = sbr.rel (0) target = $region9
    $region8: #{tpu_custom_call.1} parent=1 // pred_region
      %s31 = ssub.s32 1024, 1024
      %32 = vsyncadd [#allocation6], %s31
      %s33 = sshll.u32 [#allocation5], 4
      %s34 = int_to_ptr.vmem [resolvable:$true] %s33
      %39 = dma.hbm_to_vmem [thread:$0]  %s1, 1024, %s34, [#allocation6], 256, 256, 16
    $region9: #{tpu_custom_call.1} parent=1 // pred_fallthru
      _
    // Predicated region
    $region10: #{tpu_custom_call.1} parent=1 // pred_check
      _
    $region11: #{tpu_custom_call.1} parent=1 // pred_check_branch
      %41 = sbr.rel (0) target = $region13
    $region12: #{tpu_custom_call.1} parent=1 // pred_region
      _
    $region13: #{tpu_custom_call.1} parent=1 // pred_fallthru
      _
    // Predicated region
    $region14: #{tpu_custom_call.1} parent=1 // pred_check
      _
    $region15: #{tpu_custom_call.1} parent=1 // pred_check_branch
      %43 = sbr.rel (0) target = $region17
    $region16: #{tpu_custom_call.1} parent=1 // pred_region
      %s45 = ssub.s32 1024, 1024
      %46 = vsyncadd [#allocation6], %s45
      %s47 = sshll.u32 [#allocation7], 4
      %s48 = int_to_ptr.vmem [resolvable:$true] %s47
      %53 = dma.hbm_to_vmem [thread:$0]  %s3, 1024, %s48, [#allocation6], 128, 128, 8
    $region17: #{tpu_custom_call.1} parent=1 // pred_fallthru
      _
    // Predicated region
    $region18: #{tpu_custom_call.1} parent=1 // pred_check
      _
    $region19: #{tpu_custom_call.1} parent=1 // pred_check_branch
      %55 = sbr.rel (0) target = $region21
    $region20: #{tpu_custom_call.1} parent=1 // pred_region
      _
    $region21: #{tpu_custom_call.1} parent=1 // pred_fallthru
      _
    // Predicated region
    $region22: #{tpu_custom_call.1} parent=1 // pred_check
      _
    $region23: #{tpu_custom_call.1} parent=1 // pred_check_branch
      %57 = sbr.rel (0) target = $region25
    $region24: #{tpu_custom_call.1} parent=1 // pred_region
      %s59 = ssub.s32 4096, 4096
      %60 = vsyncadd [#allocation9], %s59
      %s61 = sshll.u32 [#allocation8], 4
      %s62 = int_to_ptr.vmem [resolvable:$true] %s61
      %67 = dma.hbm_to_vmem [thread:$0]  %s5, 4096, %s62, [#allocation9], 256, 256, 16
    $region25: #{tpu_custom_call.1} parent=1 // pred_fallthru
      _
    // Predicated region
    $region26: #{tpu_custom_call.1} parent=1 // pred_check
      _
    $region27: #{tpu_custom_call.1} parent=1 // pred_check_branch
      %69 = sbr.rel (0) target = $region29
    $region28: #{tpu_custom_call.1} parent=1 // pred_region
      _
    $region29: #{tpu_custom_call.1} parent=1 // pred_fallthru
      _
    // Predicated region
    $region30: #{tpu_custom_call.1} parent=1 // pred_check
      _
    $region31: #{tpu_custom_call.1} parent=1 // pred_check_branch
      %71 = sbr.rel (0) target = $region33
    $region32: #{tpu_custom_call.1} parent=1 // pred_region
      %72 = dma.done [#allocation3], 256
    $region33: #{tpu_custom_call.1} parent=1 // pred_fallthru
      _
    // Predicated region
    $region34: #{tpu_custom_call.1} parent=1 // pred_check
      _
    $region35: #{tpu_custom_call.1} parent=1 // pred_check_branch
      %74 = sbr.rel (0) target = $region37
    $region36: #{tpu_custom_call.1} parent=1 // pred_region
      %75 = dma.done [#allocation6], 1024
    $region37: #{tpu_custom_call.1} parent=1 // pred_fallthru
      _
    // Predicated region
    $region38: #{tpu_custom_call.1} parent=1 // pred_check
      _
    $region39: #{tpu_custom_call.1} parent=1 // pred_check_branch
      %77 = sbr.rel (0) target = $region41
    $region40: #{tpu_custom_call.1} parent=1 // pred_region
      %78 = dma.done [#allocation6], 1024
    $region41: #{tpu_custom_call.1} parent=1 // pred_fallthru
      _
    // Predicated region
    $region42: #{tpu_custom_call.1} parent=1 // pred_check
      _
    $region43: #{tpu_custom_call.1} parent=1 // pred_check_branch
      %80 = sbr.rel (0) target = $region45
    $region44: #{tpu_custom_call.1} parent=1 // pred_region
      %81 = dma.done [#allocation9], 4096
    $region45: #{tpu_custom_call.1} parent=1 // pred_fallthru
      _
    %v82 = vld [vmem:[#allocation2] sm:$0xff]
    %v83 = vld [vmem:[#allocation2 + $0x8] sm:$0xff]
    %v84 = vld [vmem:[#allocation5] sm:$0xff]
    %v85 = vld [vmem:[#allocation5 + $0x8] sm:$0xff]
    %v86 = vld [vmem:[#allocation5 + $0x10] sm:$0xff]
    %v87 = vld [vmem:[#allocation5 + $0x18] sm:$0xff]
    %v88 = vld [vmem:[#allocation5 + $0x20] sm:$0xff]
    %v89 = vld [vmem:[#allocation5 + $0x28] sm:$0xff]
    %v90 = vld [vmem:[#allocation5 + $0x30] sm:$0xff]
    %v91 = vld [vmem:[#allocation5 + $0x38] sm:$0xff]
    %v92 = vld [vmem:[%s2] sm:$0x3]
    %v94 = vlaneseq
    %v95 = vshrl.u32 %v94, 7
    %v96 = vsub.s32 0, %v95
    %v97 = vrot.slane %v92, %v96
    %v98 = vlaneseq
    %v99 = vshrl.u32 %v98, 7
    %v100 = vsub.s32 1, %v99
    %v101 = vrot.slane %v92, %v100
    %vm104 = vcmask 261120
    %v106 = vsel %vm104, %v82, 0
    %v109 = vsel %vm104, %v83, 0
    %111 = vmatprep.subr.mxu0 %v85
    %112 = vmatpush1.msra.mxu0 %v84
    %113 = vmatprep.subr.mxu0 %v87
    %114 = vmatpush1.msra.mxu0 %v86
    %115 = vmatprep.subr.mxu0 %v89
    %116 = vmatpush1.msra.mxu0 %v88
    %117 = vmatprep.subr.mxu0 %v91
    %118 = vmatpush1.msra.mxu0 %v90
    %119 = vmatprep.subr.mxu0 0.0
    %120 = vmatpush1.msra.mxu0 0.0
    %121 = vmatprep.subr.mxu0 0.0
    %122 = vmatpush1.msra.mxu0 0.0
    %123 = vmatprep.subr.mxu0 0.0
    %124 = vmatpush1.msra.mxu0 0.0
    %125 = vmatprep.subr.mxu0 0.0
    %126 = vmatpush1.msra.mxu0 0.0
    %127 = vmatprep.subr.mxu0 0.0
    %128 = vmatpush1.msra.mxu0 0.0
    %129 = vmatprep.subr.mxu0 0.0
    %130 = vmatpush1.msra.mxu0 0.0
    %131 = vmatprep.subr.mxu0 0.0
    %132 = vmatpush1.msra.mxu0 0.0
    %133 = vmatprep.subr.mxu0 0.0
    %134 = vmatpush1.msra.mxu0 0.0
    %135 = vmatprep.subr.mxu0 0.0
    %136 = vmatpush1.msra.mxu0 0.0
    %137 = vmatprep.subr.mxu0 0.0
    %138 = vmatpush1.msra.mxu0 0.0
    %139 = vmatprep.subr.mxu0 0.0
    %140 = vmatpush1.msra.mxu0 0.0
    %141 = vmatprep.subr.mxu0 0.0
    %142 = vmatpush1.msra.mxu0 0.0
    %143 = vmatprep.subr.mxu0 0.0
    %144 = vmatpush1.msra.mxu0 0.0
    %145 = vmatprep.subr.mxu0 0.0
    %146 = vmatpush1.msra.mxu0 0.0
    %147 = vmatprep.subr.mxu0 0.0
    %148 = vmatpush1.msra.mxu0 0.0
    %149 = vmatprep.subr.mxu0 0.0
    %150 = vmatpush1.msra.mxu0 0.0
    %151 = vmatprep.subr.mxu0 0.0
    %152 = vmatpush1.msra.mxu0 0.0
    %153 = vmatprep.subr.mxu0 0.0
    %154 = vmatpush1.msra.mxu0 0.0
    %155 = vmatprep.subr.mxu0 0.0
    %156 = vmatpush1.msra.mxu0 0.0
    %157 = vmatprep.subr.mxu0 0.0
    %158 = vmatpush1.msra.mxu0 0.0
    %159 = vmatprep.subr.mxu0 0.0
    %160 = vmatpush1.msra.mxu0 0.0
    %161 = vmatprep.subr.mxu0 0.0
    %162 = vmatpush1.msra.mxu0 0.0
    %163 = vmatprep.subr.mxu0 0.0
    %164 = vmatpush1.msra.mxu0 0.0
    %165 = vmatprep.subr.mxu0 0.0
    %166 = vmatpush1.msra.mxu0 0.0
    %167 = vmatprep.subr.mxu0 0.0
    %168 = vmatpush1.msra.mxu0 0.0
    %169 = vmatprep.subr.mxu0 0.0
    %170 = vmatpush1.msra.mxu0 0.0
    %171 = vmatprep.subr.mxu0 0.0
    %172 = vmatpush1.msra.mxu0 0.0
    %173 = vmatprep.subr.mxu0 0.0
    %174 = vmatpush1.msra.mxu0 0.0
    %175 = vmatprep.mubr.f32.mxu0 0.0
    %176 = vmatmul.mubr.f32.gmra.mrb[0].mxu0 %v106
    %v177 = vpop.f32.mrb[0].mxu0
    %v178 = vadd.f32 %v97, %v177
    %v179 = vpop.f32.mrb[0].mxu0
    %v180 = vadd.f32 %v101, %v179
    %181 = vmatprep.mubr.f32.mxu0 0.0
    %182 = vmatmul.mubr.f32.gmra.mrb[0].mxu0 %v109
    %v183 = vpop.f32.mrb[0].mxu0
    %v184 = vadd.f32 %v97, %v183
    %v185 = vpop.f32.mrb[0].mxu0
    %v186 = vadd.f32 %v101, %v185
    %187 = vdwg.mxu0
    %189 = vrot.lane.b32.xlu0 %v178, 64
    %v190 = vpop.permute.xlu0 %189
    %vm191 = vcmask 523264
    %v192 = vsel %vm191, %v178, 0
    %v194 = vsel %vm191, %v190, 0
    %196 = vmatprep.subr.mxu0 0.0
    %197 = vmatpush1.xpose.msra.mxu0 %v194
    %198 = vmatprep.subr.mxu0 0.0
    %199 = vmatpush1.xpose.msra.mxu0 0.0
    %200 = vmatprep.subr.mxu0 0.0
    %201 = vmatpush1.xpose.msra.mxu0 0.0
    %202 = vmatprep.subr.mxu0 0.0
    %203 = vmatpush1.xpose.msra.mxu0 0.0
    %204 = vmatprep.subr.mxu0 0.0
    %205 = vmatpush1.xpose.msra.mxu0 0.0
    %206 = vmatprep.subr.mxu0 0.0
    %207 = vmatpush1.xpose.msra.mxu0 0.0
    %208 = vmatprep.subr.mxu0 0.0
    %209 = vmatpush1.xpose.msra.mxu0 0.0
    %210 = vmatprep.subr.mxu0 0.0
    %211 = vmatpush1.xpose.msra.mxu0 0.0
    %212 = vmatprep.subr.mxu0 0.0
    %213 = vmatpush1.xpose.msra.mxu0 0.0
    %214 = vmatprep.subr.mxu0 0.0
    %215 = vmatpush1.xpose.msra.mxu0 0.0
    %216 = vmatprep.subr.mxu0 0.0
    %217 = vmatpush1.xpose.msra.mxu0 0.0
    %218 = vmatprep.subr.mxu0 0.0
    %219 = vmatpush1.xpose.msra.mxu0 0.0
    %220 = vmatprep.subr.mxu0 0.0
    %221 = vmatpush1.xpose.msra.mxu0 0.0
    %222 = vmatprep.subr.mxu0 0.0
    %223 = vmatpush1.xpose.msra.mxu0 0.0
    %224 = vmatprep.subr.mxu0 0.0
    %225 = vmatpush1.xpose.msra.mxu0 0.0
    %226 = vmatprep.subr.mxu0 0.0
    %227 = vmatpush1.xpose.msra.mxu0 0.0
    %228 = vmatprep.subr.mxu0 0.0
    %229 = vmatpush1.xpose.msra.mxu0 0.0
    %230 = vmatprep.subr.mxu0 0.0
    %231 = vmatpush1.xpose.msra.mxu0 0.0
    %232 = vmatprep.subr.mxu0 0.0
    %233 = vmatpush1.xpose.msra.mxu0 0.0
    %234 = vmatprep.subr.mxu0 0.0
    %235 = vmatpush1.xpose.msra.mxu0 0.0
    %236 = vmatprep.subr.mxu0 0.0
    %237 = vmatpush1.xpose.msra.mxu0 0.0
    %238 = vmatprep.subr.mxu0 0.0
    %239 = vmatpush1.xpose.msra.mxu0 0.0
    %240 = vmatprep.subr.mxu0 0.0
    %241 = vmatpush1.xpose.msra.mxu0 0.0
    %242 = vmatprep.subr.mxu0 0.0
    %243 = vmatpush1.xpose.msra.mxu0 0.0
    %244 = vmatprep.subr.mxu0 0.0
    %245 = vmatpush1.xpose.msra.mxu0 0.0
    %246 = vmatprep.subr.mxu0 0.0
    %247 = vmatpush1.xpose.msra.mxu0 0.0
    %248 = vmatprep.subr.mxu0 0.0
    %249 = vmatpush1.xpose.msra.mxu0 0.0
    %250 = vmatprep.subr.mxu0 0.0
    %251 = vmatpush1.xpose.msra.mxu0 0.0
    %252 = vmatprep.subr.mxu0 0.0
    %253 = vmatpush1.xpose.msra.mxu0 0.0
    %254 = vmatprep.subr.mxu0 0.0
    %255 = vmatpush1.xpose.msra.mxu0 0.0
    %256 = vmatprep.subr.mxu0 0.0
    %257 = vmatpush1.xpose.msra.mxu0 0.0
    %258 = vmatprep.subr.mxu0 0.0
    %259 = vmatpush1.xpose.msra.mxu0 0.0
    %260 = vmatprep.mubr.f32.mxu0 0.0
    %261 = vmatmul.mubr.f32.gmra.mrb[0].mxu0 %v192
    %v262 = vpop.f32.mrb[0].mxu0
    %v263 = vadd.f32 0.0, %v262
    %v264 = vpop.f32.mrb[0].mxu0
    %265 = vdwg.mxu0
    %267 = vrot.lane.b32.xlu0 %v184, 64
    %v268 = vpop.permute.xlu0 %267
    %v269 = vsel %vm191, %v184, 0
    %v271 = vsel %vm191, %v268, 0
    %273 = vmatprep.subr.mxu0 0.0
    %274 = vmatpush1.xpose.msra.mxu0 %v271
    %275 = vmatprep.subr.mxu0 0.0
    %276 = vmatpush1.xpose.msra.mxu0 0.0
    %277 = vmatprep.subr.mxu0 0.0
    %278 = vmatpush1.xpose.msra.mxu0 0.0
    %279 = vmatprep.subr.mxu0 0.0
    %280 = vmatpush1.xpose.msra.mxu0 0.0
    %281 = vmatprep.subr.mxu0 0.0
    %282 = vmatpush1.xpose.msra.mxu0 0.0
    %283 = vmatprep.subr.mxu0 0.0
    %284 = vmatpush1.xpose.msra.mxu0 0.0
    %285 = vmatprep.subr.mxu0 0.0
    %286 = vmatpush1.xpose.msra.mxu0 0.0
    %287 = vmatprep.subr.mxu0 0.0
    %288 = vmatpush1.xpose.msra.mxu0 0.0
    %289 = vmatprep.subr.mxu0 0.0
    %290 = vmatpush1.xpose.msra.mxu0 0.0
    %291 = vmatprep.subr.mxu0 0.0
    %292 = vmatpush1.xpose.msra.mxu0 0.0
    %293 = vmatprep.subr.mxu0 0.0
    %294 = vmatpush1.xpose.msra.mxu0 0.0
    %295 = vmatprep.subr.mxu0 0.0
    %296 = vmatpush1.xpose.msra.mxu0 0.0
    %297 = vmatprep.subr.mxu0 0.0
    %298 = vmatpush1.xpose.msra.mxu0 0.0
    %299 = vmatprep.subr.mxu0 0.0
    %300 = vmatpush1.xpose.msra.mxu0 0.0
    %301 = vmatprep.subr.mxu0 0.0
    %302 = vmatpush1.xpose.msra.mxu0 0.0
    %303 = vmatprep.subr.mxu0 0.0
    %304 = vmatpush1.xpose.msra.mxu0 0.0
    %305 = vmatprep.subr.mxu0 0.0
    %306 = vmatpush1.xpose.msra.mxu0 0.0
    %307 = vmatprep.subr.mxu0 0.0
    %308 = vmatpush1.xpose.msra.mxu0 0.0
    %309 = vmatprep.subr.mxu0 0.0
    %310 = vmatpush1.xpose.msra.mxu0 0.0
    %311 = vmatprep.subr.mxu0 0.0
    %312 = vmatpush1.xpose.msra.mxu0 0.0
    %313 = vmatprep.subr.mxu0 0.0
    %314 = vmatpush1.xpose.msra.mxu0 0.0
    %315 = vmatprep.subr.mxu0 0.0
    %316 = vmatpush1.xpose.msra.mxu0 0.0
    %317 = vmatprep.subr.mxu0 0.0
    %318 = vmatpush1.xpose.msra.mxu0 0.0
    %319 = vmatprep.subr.mxu0 0.0
    %320 = vmatpush1.xpose.msra.mxu0 0.0
    %321 = vmatprep.subr.mxu0 0.0
    %322 = vmatpush1.xpose.msra.mxu0 0.0
    %323 = vmatprep.subr.mxu0 0.0
    %324 = vmatpush1.xpose.msra.mxu0 0.0
    %325 = vmatprep.subr.mxu0 0.0
    %326 = vmatpush1.xpose.msra.mxu0 0.0
    %327 = vmatprep.subr.mxu0 0.0
    %328 = vmatpush1.xpose.msra.mxu0 0.0
    %329 = vmatprep.subr.mxu0 0.0
    %330 = vmatpush1.xpose.msra.mxu0 0.0
    %331 = vmatprep.subr.mxu0 0.0
    %332 = vmatpush1.xpose.msra.mxu0 0.0
    %333 = vmatprep.subr.mxu0 0.0
    %334 = vmatpush1.xpose.msra.mxu0 0.0
    %335 = vmatprep.subr.mxu0 0.0
    %336 = vmatpush1.xpose.msra.mxu0 0.0
    %337 = vmatprep.mubr.f32.mxu0 0.0
    %338 = vmatmul.mubr.f32.gmra.mrb[0].mxu0 %v269
    %v339 = vpop.f32.mrb[0].mxu0
    %v340 = vadd.f32 0.0, %v339
    %v341 = vpop.f32.mrb[0].mxu0
    %342 = vdwg.mxu0
    %v343 = vmul.f32 %v263, 0.125
    %v344 = vmul.f32 %v340, 0.125
    %vm345 = vcmask 64512
    %v346 = vsel %vm345, %v343, -inf
    %347 = vmax.xlane.f32.xlu0 %v346
    %v348 = vpop.xlane.xlu0 %347
    %v349 = vsel %vm345, %v344, -inf
    %350 = vmax.xlane.f32.xlu0 %v349
    %v351 = vpop.xlane.xlu0 %350
    %v352 = vsub.f32 %v343, %v348
    %v353 = vsub.f32 %v344, %v351
    %v354 = vmul.f32 %v352, 1.442695
    %v355 = vpow.pop %v354
    %v356 = vmul.f32 %v353, 1.442695
    %v357 = vpow.pop %v356
    %v358 = vsel %vm345, %v355, 0.0
    %359 = vadd.xlane.f32.xlu0 %v358
    %v360 = vpop.xlane.xlu0 %359
    %v361 = vsel %vm345, %v357, 0.0
    %362 = vadd.xlane.f32.xlu0 %v361
    %v363 = vpop.xlane.xlu0 %362
    %v364 = vrcp.pop %v360
    %v365 = vmul.f32 %v355, %v364
    %v366 = vrcp.pop %v363
    %v367 = vmul.f32 %v357, %v366
    %v369 = vsel %vm345, %v365, 0
    %371 = vmatprep.subr.mxu0 0.0
    %372 = vmatpush1.msra.mxu0 %v180
    %373 = vmatprep.subr.mxu0 0.0
    %374 = vmatpush1.msra.mxu0 0.0
    %375 = vmatprep.subr.mxu0 0.0
    %376 = vmatpush1.msra.mxu0 0.0
    %377 = vmatprep.subr.mxu0 0.0
    %378 = vmatpush1.msra.mxu0 0.0
    %379 = vmatprep.subr.mxu0 0.0
    %380 = vmatpush1.msra.mxu0 0.0
    %381 = vmatprep.subr.mxu0 0.0
    %382 = vmatpush1.msra.mxu0 0.0
    %383 = vmatprep.subr.mxu0 0.0
    %384 = vmatpush1.msra.mxu0 0.0
    %385 = vmatprep.subr.mxu0 0.0
    %386 = vmatpush1.msra.mxu0 0.0
    %387 = vmatprep.subr.mxu0 0.0
    %388 = vmatpush1.msra.mxu0 0.0
    %389 = vmatprep.subr.mxu0 0.0
    %390 = vmatpush1.msra.mxu0 0.0
    %391 = vmatprep.subr.mxu0 0.0
    %392 = vmatpush1.msra.mxu0 0.0
    %393 = vmatprep.subr.mxu0 0.0
    %394 = vmatpush1.msra.mxu0 0.0
    %395 = vmatprep.subr.mxu0 0.0
    %396 = vmatpush1.msra.mxu0 0.0
    %397 = vmatprep.subr.mxu0 0.0
    %398 = vmatpush1.msra.mxu0 0.0
    %399 = vmatprep.subr.mxu0 0.0
    %400 = vmatpush1.msra.mxu0 0.0
    %401 = vmatprep.subr.mxu0 0.0
    %402 = vmatpush1.msra.mxu0 0.0
    %403 = vmatprep.subr.mxu0 0.0
    %404 = vmatpush1.msra.mxu0 0.0
    %405 = vmatprep.subr.mxu0 0.0
    %406 = vmatpush1.msra.mxu0 0.0
    %407 = vmatprep.subr.mxu0 0.0
    %408 = vmatpush1.msra.mxu0 0.0
    %409 = vmatprep.subr.mxu0 0.0
    %410 = vmatpush1.msra.mxu0 0.0
    %411 = vmatprep.subr.mxu0 0.0
    %412 = vmatpush1.msra.mxu0 0.0
    %413 = vmatprep.subr.mxu0 0.0
    %414 = vmatpush1.msra.mxu0 0.0
    %415 = vmatprep.subr.mxu0 0.0
    %416 = vmatpush1.msra.mxu0 0.0
    %417 = vmatprep.subr.mxu0 0.0
    %418 = vmatpush1.msra.mxu0 0.0
    %419 = vmatprep.subr.mxu0 0.0
    %420 = vmatpush1.msra.mxu0 0.0
    %421 = vmatprep.subr.mxu0 0.0
    %422 = vmatpush1.msra.mxu0 0.0
    %423 = vmatprep.subr.mxu0 0.0
    %424 = vmatpush1.msra.mxu0 0.0
    %425 = vmatprep.subr.mxu0 0.0
    %426 = vmatpush1.msra.mxu0 0.0
    %427 = vmatprep.subr.mxu0 0.0
    %428 = vmatpush1.msra.mxu0 0.0
    %429 = vmatprep.subr.mxu0 0.0
    %430 = vmatpush1.msra.mxu0 0.0
    %431 = vmatprep.subr.mxu0 0.0
    %432 = vmatpush1.msra.mxu0 0.0
    %433 = vmatprep.subr.mxu0 0.0
    %434 = vmatpush1.msra.mxu0 0.0
    %435 = vmatprep.mubr.f32.mxu0 0.0
    %436 = vmatmul.mubr.f32.gmra.mrb[0].mxu0 %v369
    %v437 = vpop.f32.mrb[0].mxu0
    %v438 = vadd.f32 0.0, %v437
    %v439 = vpop.f32.mrb[0].mxu0
    %440 = vdwg.mxu0
    %v442 = vsel %vm345, %v367, 0
    %444 = vmatprep.subr.mxu0 0.0
    %445 = vmatpush1.msra.mxu0 %v186
    %446 = vmatprep.subr.mxu0 0.0
    %447 = vmatpush1.msra.mxu0 0.0
    %448 = vmatprep.subr.mxu0 0.0
    %449 = vmatpush1.msra.mxu0 0.0
    %450 = vmatprep.subr.mxu0 0.0
    %451 = vmatpush1.msra.mxu0 0.0
    %452 = vmatprep.subr.mxu0 0.0
    %453 = vmatpush1.msra.mxu0 0.0
    %454 = vmatprep.subr.mxu0 0.0
    %455 = vmatpush1.msra.mxu0 0.0
    %456 = vmatprep.subr.mxu0 0.0
    %457 = vmatpush1.msra.mxu0 0.0
    %458 = vmatprep.subr.mxu0 0.0
    %459 = vmatpush1.msra.mxu0 0.0
    %460 = vmatprep.subr.mxu0 0.0
    %461 = vmatpush1.msra.mxu0 0.0
    %462 = vmatprep.subr.mxu0 0.0
    %463 = vmatpush1.msra.mxu0 0.0
    %464 = vmatprep.subr.mxu0 0.0
    %465 = vmatpush1.msra.mxu0 0.0
    %466 = vmatprep.subr.mxu0 0.0
    %467 = vmatpush1.msra.mxu0 0.0
    %468 = vmatprep.subr.mxu0 0.0
    %469 = vmatpush1.msra.mxu0 0.0
    %470 = vmatprep.subr.mxu0 0.0
    %471 = vmatpush1.msra.mxu0 0.0
    %472 = vmatprep.subr.mxu0 0.0
    %473 = vmatpush1.msra.mxu0 0.0
    %474 = vmatprep.subr.mxu0 0.0
    %475 = vmatpush1.msra.mxu0 0.0
    %476 = vmatprep.subr.mxu0 0.0
    %477 = vmatpush1.msra.mxu0 0.0
    %478 = vmatprep.subr.mxu0 0.0
    %479 = vmatpush1.msra.mxu0 0.0
    %480 = vmatprep.subr.mxu0 0.0
    %481 = vmatpush1.msra.mxu0 0.0
    %482 = vmatprep.subr.mxu0 0.0
    %483 = vmatpush1.msra.mxu0 0.0
    %484 = vmatprep.subr.mxu0 0.0
    %485 = vmatpush1.msra.mxu0 0.0
    %486 = vmatprep.subr.mxu0 0.0
    %487 = vmatpush1.msra.mxu0 0.0
    %488 = vmatprep.subr.mxu0 0.0
    %489 = vmatpush1.msra.mxu0 0.0
    %490 = vmatprep.subr.mxu0 0.0
    %491 = vmatpush1.msra.mxu0 0.0
    %492 = vmatprep.subr.mxu0 0.0
    %493 = vmatpush1.msra.mxu0 0.0
    %494 = vmatprep.subr.mxu0 0.0
    %495 = vmatpush1.msra.mxu0 0.0
    %496 = vmatprep.subr.mxu0 0.0
    %497 = vmatpush1.msra.mxu0 0.0
    %498 = vmatprep.subr.mxu0 0.0
    %499 = vmatpush1.msra.mxu0 0.0
    %500 = vmatprep.subr.mxu0 0.0
    %501 = vmatpush1.msra.mxu0 0.0
    %502 = vmatprep.subr.mxu0 0.0
    %503 = vmatpush1.msra.mxu0 0.0
    %504 = vmatprep.subr.mxu0 0.0
    %505 = vmatpush1.msra.mxu0 0.0
    %506 = vmatprep.subr.mxu0 0.0
    %507 = vmatpush1.msra.mxu0 0.0
    %508 = vmatprep.mubr.f32.mxu0 0.0
    %509 = vmatmul.mubr.f32.gmra.mrb[0].mxu0 %v442
    %v510 = vpop.f32.mrb[0].mxu0
    %v511 = vadd.f32 0.0, %v510
    %v512 = vpop.f32.mrb[0].mxu0
    %513 = vdwg.mxu0
    %v514 = vld [vmem:[#allocation7] sm:$0xff]
    %v515 = vld [vmem:[#allocation7 + $0x8] sm:$0xff]
    %v516 = vld [vmem:[#allocation7 + $0x10] sm:$0xff]
    %v517 = vld [vmem:[#allocation7 + $0x18] sm:$0xff]
    %v518 = vld [vmem:[#allocation7 + $0x20] sm:$0xff]
    %v519 = vld [vmem:[#allocation7 + $0x28] sm:$0xff]
    %v520 = vld [vmem:[#allocation7 + $0x30] sm:$0xff]
    %v521 = vld [vmem:[#allocation7 + $0x38] sm:$0xff]
    %v522 = vld [vmem:[%s4] sm:$0x1]
    %v524 = vlaneseq
    %v525 = vshrl.u32 %v524, 7
    %v526 = vsub.s32 0, %v525
    %v527 = vrot.slane %v522, %v526
    %v530 = vsel %vm191, %v438, 0
    %v533 = vsel %vm191, %v511, 0
    %535 = vmatprep.subr.mxu0 0.0
    %536 = vmatpush1.msra.mxu0 %v514
    %537 = vmatprep.subr.mxu0 0.0
    %538 = vmatpush1.msra.mxu0 %v515
    %539 = vmatprep.subr.mxu0 0.0
    %540 = vmatpush1.msra.mxu0 %v516
    %541 = vmatprep.subr.mxu0 0.0
    %542 = vmatpush1.msra.mxu0 %v517
    %543 = vmatprep.subr.mxu0 0.0
    %544 = vmatpush1.msra.mxu0 %v518
    %545 = vmatprep.subr.mxu0 0.0
    %546 = vmatpush1.msra.mxu0 %v519
    %547 = vmatprep.subr.mxu0 0.0
    %548 = vmatpush1.msra.mxu0 %v520
    %549 = vmatprep.subr.mxu0 0.0
    %550 = vmatpush1.msra.mxu0 %v521
    %551 = vmatprep.subr.mxu0 0.0
    %552 = vmatpush1.msra.mxu0 0.0
    %553 = vmatprep.subr.mxu0 0.0
    %554 = vmatpush1.msra.mxu0 0.0
    %555 = vmatprep.subr.mxu0 0.0
    %556 = vmatpush1.msra.mxu0 0.0
    %557 = vmatprep.subr.mxu0 0.0
    %558 = vmatpush1.msra.mxu0 0.0
    %559 = vmatprep.subr.mxu0 0.0
    %560 = vmatpush1.msra.mxu0 0.0
    %561 = vmatprep.subr.mxu0 0.0
    %562 = vmatpush1.msra.mxu0 0.0
    %563 = vmatprep.subr.mxu0 0.0
    %564 = vmatpush1.msra.mxu0 0.0
    %565 = vmatprep.subr.mxu0 0.0
    %566 = vmatpush1.msra.mxu0 0.0
    %567 = vmatprep.subr.mxu0 0.0
    %568 = vmatpush1.msra.mxu0 0.0
    %569 = vmatprep.subr.mxu0 0.0
    %570 = vmatpush1.msra.mxu0 0.0
    %571 = vmatprep.subr.mxu0 0.0
    %572 = vmatpush1.msra.mxu0 0.0
    %573 = vmatprep.subr.mxu0 0.0
    %574 = vmatpush1.msra.mxu0 0.0
    %575 = vmatprep.subr.mxu0 0.0
    %576 = vmatpush1.msra.mxu0 0.0
    %577 = vmatprep.subr.mxu0 0.0
    %578 = vmatpush1.msra.mxu0 0.0
    %579 = vmatprep.subr.mxu0 0.0
    %580 = vmatpush1.msra.mxu0 0.0
    %581 = vmatprep.subr.mxu0 0.0
    %582 = vmatpush1.msra.mxu0 0.0
    %583 = vmatprep.subr.mxu0 0.0
    %584 = vmatpush1.msra.mxu0 0.0
    %585 = vmatprep.subr.mxu0 0.0
    %586 = vmatpush1.msra.mxu0 0.0
    %587 = vmatprep.subr.mxu0 0.0
    %588 = vmatpush1.msra.mxu0 0.0
    %589 = vmatprep.subr.mxu0 0.0
    %590 = vmatpush1.msra.mxu0 0.0
    %591 = vmatprep.subr.mxu0 0.0
    %592 = vmatpush1.msra.mxu0 0.0
    %593 = vmatprep.subr.mxu0 0.0
    %594 = vmatpush1.msra.mxu0 0.0
    %595 = vmatprep.subr.mxu0 0.0
    %596 = vmatpush1.msra.mxu0 0.0
    %597 = vmatprep.subr.mxu0 0.0
    %598 = vmatpush1.msra.mxu0 0.0
    %599 = vmatprep.mubr.f32.mxu0 0.0
    %600 = vmatmul.mubr.f32.gmra.mrb[0].mxu0 %v530
    %v601 = vpop.f32.mrb[0].mxu0
    %v602 = vadd.f32 %v527, %v601
    %v603 = vpop.f32.mrb[0].mxu0
    %604 = vmatprep.mubr.f32.mxu0 0.0
    %605 = vmatmul.mubr.f32.gmra.mrb[0].mxu0 %v533
    %v606 = vpop.f32.mrb[0].mxu0
    %v607 = vadd.f32 %v527, %v606
    %v608 = vpop.f32.mrb[0].mxu0
    %609 = vdwg.mxu0
    %v610 = vtanh.pop %v602
    %v611 = vtanh.pop %v607
    %v612 = vld [vmem:[#allocation8] sm:$0xff]
    %v613 = vld [vmem:[#allocation8 + $0x8] sm:$0xff]
    %v614 = vld [vmem:[#allocation8 + $0x10] sm:$0xff]
    %v615 = vld [vmem:[#allocation8 + $0x18] sm:$0xff]
    %v616 = vld [vmem:[#allocation8 + $0x20] sm:$0xff]
    %v617 = vld [vmem:[#allocation8 + $0x28] sm:$0xff]
    %v618 = vld [vmem:[#allocation8 + $0x30] sm:$0xff]
    %v619 = vld [vmem:[#allocation8 + $0x38] sm:$0xff]
    %v620 = vld [vmem:[#allocation8 + $0x40] sm:$0xff]
    %v621 = vld [vmem:[#allocation8 + $0x48] sm:$0xff]
    %v622 = vld [vmem:[#allocation8 + $0x50] sm:$0xff]
    %v623 = vld [vmem:[#allocation8 + $0x58] sm:$0xff]
    %v624 = vld [vmem:[#allocation8 + $0x60] sm:$0xff]
    %v625 = vld [vmem:[#allocation8 + $0x68] sm:$0xff]
    %v626 = vld [vmem:[#allocation8 + $0x70] sm:$0xff]
    %v627 = vld [vmem:[#allocation8 + $0x78] sm:$0xff]
    %v628 = vld [vmem:[#allocation8 + $0x80] sm:$0xff]
    %v629 = vld [vmem:[#allocation8 + $0x88] sm:$0xff]
    %v630 = vld [vmem:[#allocation8 + $0x90] sm:$0xff]
    %v631 = vld [vmem:[#allocation8 + $0x98] sm:$0xff]
    %v632 = vld [vmem:[#allocation8 + $0xa0] sm:$0xff]
    %v633 = vld [vmem:[#allocation8 + $0xa8] sm:$0xff]
    %v634 = vld [vmem:[#allocation8 + $0xb0] sm:$0xff]
    %v635 = vld [vmem:[#allocation8 + $0xb8] sm:$0xff]
    %v636 = vld [vmem:[#allocation8 + $0xc0] sm:$0xff]
    %v637 = vld [vmem:[#allocation8 + $0xc8] sm:$0xff]
    %v638 = vld [vmem:[#allocation8 + $0xd0] sm:$0xff]
    %v639 = vld [vmem:[#allocation8 + $0xd8] sm:$0xff]
    %v640 = vld [vmem:[#allocation8 + $0xe0] sm:$0xff]
    %v641 = vld [vmem:[#allocation8 + $0xe8] sm:$0xff]
    %v642 = vld [vmem:[#allocation8 + $0xf0] sm:$0xff]
    %v643 = vld [vmem:[#allocation8 + $0xf8] sm:$0xff]
    %v644 = vld [vmem:[%s6] sm:$0x3]
    %v646 = vlaneseq
    %v647 = vshrl.u32 %v646, 7
    %v648 = vsub.s32 0, %v647
    %v649 = vrot.slane %v644, %v648
    %v650 = vlaneseq
    %v651 = vshrl.u32 %v650, 7
    %v652 = vsub.s32 1, %v651
    %v653 = vrot.slane %v644, %v652
    %656 = vmatprep.subr.mxu0 %v613
    %657 = vmatpush1.msra.mxu0 %v612
    %658 = vmatprep.subr.mxu0 %v615
    %659 = vmatpush1.msra.mxu0 %v614
    %660 = vmatprep.subr.mxu0 %v617
    %661 = vmatpush1.msra.mxu0 %v616
    %662 = vmatprep.subr.mxu0 %v619
    %663 = vmatpush1.msra.mxu0 %v618
    %664 = vmatprep.subr.mxu0 %v621
    %665 = vmatpush1.msra.mxu0 %v620
    %666 = vmatprep.subr.mxu0 %v623
    %667 = vmatpush1.msra.mxu0 %v622
    %668 = vmatprep.subr.mxu0 %v625
    %669 = vmatpush1.msra.mxu0 %v624
    %670 = vmatprep.subr.mxu0 %v627
    %671 = vmatpush1.msra.mxu0 %v626
    %672 = vmatprep.subr.mxu0 %v629
    %673 = vmatpush1.msra.mxu0 %v628
    %674 = vmatprep.subr.mxu0 %v631
    %675 = vmatpush1.msra.mxu0 %v630
    %676 = vmatprep.subr.mxu0 %v633
    %677 = vmatpush1.msra.mxu0 %v632
    %678 = vmatprep.subr.mxu0 %v635
    %679 = vmatpush1.msra.mxu0 %v634
    %680 = vmatprep.subr.mxu0 %v637
    %681 = vmatpush1.msra.mxu0 %v636
    %682 = vmatprep.subr.mxu0 %v639
    %683 = vmatpush1.msra.mxu0 %v638
    %684 = vmatprep.subr.mxu0 %v641
    %685 = vmatpush1.msra.mxu0 %v640
    %686 = vmatprep.subr.mxu0 %v643
    %687 = vmatpush1.msra.mxu0 %v642
    %688 = vmatprep.subr.mxu0 0.0
    %689 = vmatpush1.msra.mxu0 0.0
    %690 = vmatprep.subr.mxu0 0.0
    %691 = vmatpush1.msra.mxu0 0.0
    %692 = vmatprep.subr.mxu0 0.0
    %693 = vmatpush1.msra.mxu0 0.0
    %694 = vmatprep.subr.mxu0 0.0
    %695 = vmatpush1.msra.mxu0 0.0
    %696 = vmatprep.subr.mxu0 0.0
    %697 = vmatpush1.msra.mxu0 0.0
    %698 = vmatprep.subr.mxu0 0.0
    %699 = vmatpush1.msra.mxu0 0.0
    %700 = vmatprep.subr.mxu0 0.0
    %701 = vmatpush1.msra.mxu0 0.0
    %702 = vmatprep.subr.mxu0 0.0
    %703 = vmatpush1.msra.mxu0 0.0
    %704 = vmatprep.subr.mxu0 0.0
    %705 = vmatpush1.msra.mxu0 0.0
    %706 = vmatprep.subr.mxu0 0.0
    %707 = vmatpush1.msra.mxu0 0.0
    %708 = vmatprep.subr.mxu0 0.0
    %709 = vmatpush1.msra.mxu0 0.0
    %710 = vmatprep.subr.mxu0 0.0
    %711 = vmatpush1.msra.mxu0 0.0
    %712 = vmatprep.subr.mxu0 0.0
    %713 = vmatpush1.msra.mxu0 0.0
    %714 = vmatprep.subr.mxu0 0.0
    %715 = vmatpush1.msra.mxu0 0.0
    %716 = vmatprep.subr.mxu0 0.0
    %717 = vmatpush1.msra.mxu0 0.0
    %718 = vmatprep.subr.mxu0 0.0
    %719 = vmatpush1.msra.mxu0 0.0
    %720 = vmatprep.mubr.f32.mxu0 0.0
    %721 = vmatmul.mubr.f32.gmra.mrb[0].mxu0 %v610
    %v722 = vpop.f32.mrb[0].mxu0
    %v723 = vadd.f32 %v649, %v722
    %v724 = vpop.f32.mrb[0].mxu0
    %v725 = vadd.f32 %v653, %v724
    %726 = vmatprep.mubr.f32.mxu0 0.0
    %727 = vmatmul.mubr.f32.gmra.mrb[0].mxu0 %v611
    %v728 = vpop.f32.mrb[0].mxu0
    %v729 = vadd.f32 %v649, %v728
    %v730 = vpop.f32.mrb[0].mxu0
    %v731 = vadd.f32 %v653, %v730
    %732 = vdwg.mxu0
    %v733 = vtanh.pop %v723
    %v734 = vtanh.pop %v725
    %v735 = vtanh.pop %v729
    %v736 = vtanh.pop %v731
    %737 = vst [vmem:[#allocation10] sm:$0xff] %v733
    %738 = vst [vmem:[#allocation10 + $0x8] sm:$0xff] %v734
    %739 = vst [vmem:[#allocation10 + $0x10] sm:$0xff] %v735
    %740 = vst [vmem:[#allocation10 + $0x18] sm:$0xff] %v736
    // Predicated region
    $region46: #{tpu_custom_call.1} parent=1 // pred_check
      _
    $region47: #{tpu_custom_call.1} parent=1 // pred_check_branch
      %742 = sbr.rel (0) target = $region49
    $region48: #{tpu_custom_call.1} parent=1 // pred_region
      %s744 = ssub.s32 512, 512
      %745 = vsyncadd [#allocation4], %s744
      %s746 = sshll.u32 [#allocation10], 4
      %s747 = int_to_ptr.vmem [resolvable:$true] %s746
      %752 = dma.vmem_to_hbm [thread:$0]  %s747, 512, %s7, [#allocation4], 256, 256, 16
    $region49: #{tpu_custom_call.1} parent=1 // pred_fallthru
      _
    // Predicated region
    $region50: #{tpu_custom_call.1} parent=1 // pred_check
      _
    $region51: #{tpu_custom_call.1} parent=1 // pred_check_branch
      %754 = sbr.rel (0) target = $region53
    $region52: #{tpu_custom_call.1} parent=1 // pred_region
      %755 = dma.done [#allocation4], 512
    $region53: #{tpu_custom_call.1} parent=1 // pred_fallthru
      _
    %756 = vsyncpa [#allocation3], 1
    %757 = vsyncpa [#allocation6], 1
    %758 = vsyncpa [#allocation9], 1
    %759 = vsyncpa [#allocation4], 1

</llo_original>
